<compile_context>
chip_gen: v7x
topology: tpu7x:2x2x1
jax: 0.10.0
libtpu: 0.0.40
codegen_flags: <defaults>
</compile_context>

<pallas_src>
import functools

import jax
import jax.numpy as jnp
from jax import lax
from jax.experimental import pallas as pl
from jax.experimental.pallas import tpu as pltpu


def _round_up(x, m):
    return (x + m - 1) // m * m


def _conv3_kernel(x_ref, w_ref, b_ref, o_ref, *, kh_taps, h_out):
    """One padded image -> one packed output tile.

    x_ref : (1, Hp, Wp*Cin)        bf16   padded image, channels minor
    w_ref : (KH, Wp*Cin, WCo_pad)  bf16   width-banded folded conv weight
    b_ref : (1, WCo_pad)           f32    bias tiled across the packed lanes
    o_ref : (1, H_out, WCo_pad)    f32    output packed as (h, w*Cout + c)
    """
    acc = jnp.dot(x_ref[0, 0:h_out, :], w_ref[0],
                  preferred_element_type=jnp.float32)
    for kh in range(1, kh_taps):
        acc += jnp.dot(x_ref[0, kh:kh + h_out, :], w_ref[kh],
                       preferred_element_type=jnp.float32)
    o_ref[0, :, :] = jnp.maximum(acc + b_ref[...], 0.0)


def _fold_weight(weight_oikk, w_out, wp, wco_pad):
    """Fold (Cout, Cin, KH, KW) into KH width-banded matmul operands.

    w_fold[kh, (w + kw)*Cin + ci, w*Cout + co] = weight[co, ci, kh, kw]
    so x_row(padded, shifted by kh) @ w_fold[kh] applies every kw tap for every
    output column in one lane-dense MXU matmul.
    """
    cout, cin, kh_taps, kw_taps = weight_oikk.shape
    wco = w_out * cout
    eye_w = jnp.eye(w_out, dtype=jnp.float32)
    per_kh = []
    for kh in range(kh_taps):
        acc = jnp.zeros((wp * cin, wco), jnp.float32)
        for kw in range(kw_taps):
            tap = weight_oikk[:, :, kh, kw].astype(jnp.float32).T   # (Cin, Cout)
            band = jnp.kron(eye_w, tap)                             # (W*Cin, W*Cout)
            acc = acc.at[kw * cin:(kw + w_out) * cin, :].add(band)
        per_kh.append(acc)
    w_fold = jnp.stack(per_kh)                                      # (KH, Wp*Cin, WCo)
    w_fold = jnp.pad(w_fold, ((0, 0), (0, 0), (0, wco_pad - wco)))
    return w_fold.astype(jnp.bfloat16)


def conv3_relu(x_nchw, weight_oikk, bias, *, stride=1, padding=1):
    """Forward of Conv_3: ReLU(Conv2d(x)), stride=1.

    x_nchw      : (N, Cin, H, W)       float32
    weight_oikk : (Cout, Cin, KH, KW)  PyTorch layout
    bias        : (Cout,)
    returns     : (N, Cout, H_out, W_out)  NCHW, matching PyTorch semantics.
    """
    # TODO(synk): stride != 1 not implemented (Conv_3's forward uses the default stride=1).
    assert stride == 1, "only stride=1 (module default) is implemented"
    N, Cin, H, W = x_nchw.shape
    Cout, Cin_w, KH, KW = weight_oikk.shape
    assert Cin == Cin_w

    Hp, Wp = H + 2 * padding, W + 2 * padding
    H_out, W_out = Hp - KH + 1, Wp - KW + 1

    # ---- input plumbing (input-sized only; no 9x im2col expansion in HBM) ----
    x_nhwc = jnp.transpose(x_nchw, (0, 2, 3, 1))
    xp = jnp.pad(x_nhwc, ((0, 0), (padding, padding), (padding, padding), (0, 0)))
    x_flat = xp.reshape(N, Hp, Wp * Cin).astype(jnp.bfloat16)

    # ---- folded weight / bias; output lanes are packed (w*Cout + c) ----
    WCo = W_out * Cout
    WCo_pad = _round_up(WCo, 128)     # == 128 exactly at the test size -> zero dead lanes
    w_fold = _fold_weight(weight_oikk, W_out, Wp, WCo_pad)
    b_row = jnp.pad(jnp.tile(bias.astype(jnp.float32), W_out),
                    (0, WCo_pad - WCo)).reshape(1, WCo_pad)

    # Advisory cost estimate: helps XLA schedule the surrounding glue ops.
    flops = 2 * N * KH * H_out * (Wp * Cin) * WCo_pad
    bytes_accessed = (x_flat.size * 2 + w_fold.size * 2
                      + b_row.size * 4 + N * H_out * WCo_pad * 4)

    out = pl.pallas_call(
        functools.partial(_conv3_kernel, kh_taps=KH, h_out=H_out),
        out_shape=jax.ShapeDtypeStruct((N, H_out, WCo_pad), jnp.float32),
        grid_spec=pltpu.PrefetchScalarGridSpec(
            num_scalar_prefetch=0,
            grid=(N,),                           # 1 image / step; even -> both v7x TCs
            in_specs=[
                pl.BlockSpec((1, Hp, Wp * Cin), lambda n: (n, 0, 0)),
                pl.BlockSpec((KH, Wp * Cin, WCo_pad), lambda n: (0, 0, 0)),
                pl.BlockSpec((1, WCo_pad), lambda n: (0, 0)),
            ],
            out_specs=pl.BlockSpec((1, H_out, WCo_pad), lambda n: (n, 0, 0)),
        ),
        compiler_params=pltpu.CompilerParams(
            dimension_semantics=("parallel",),
            # VMEM per step is a few tens of KiB here; raise vmem_limit_bytes
            # only if the folded weight grows toward the 32 MiB scoped default.
        ),
        cost_estimate=pl.CostEstimate(flops=flops, transcendentals=0,
                                      bytes_accessed=bytes_accessed),
    )(x_flat, w_fold, b_row)

    # Unpack (h, w*Cout + c) -> NHWC -> NCHW.  True-sized output only; the
    # final transpose is required by the module's NCHW contract.
    out = out[:, :, :WCo].reshape(N, H_out, W_out, Cout)
    return jnp.transpose(out, (0, 3, 1, 2))


def _reference(x_nchw, weight_oikk, bias, *, padding=1):
    # Pure-JAX reference (XLA conv, forced f32) for correctness check.
    out = lax.conv_general_dilated(
        x_nchw.astype(jnp.float32), weight_oikk.astype(jnp.float32),
        window_strides=(1, 1),
        padding=((padding, padding), (padding, padding)),
        dimension_numbers=("NCHW", "OIHW", "NCHW"),
        precision=lax.Precision.HIGHEST,
    )
    out = out + bias.reshape(1, -1, 1, 1)
    return jnp.maximum(out, 0.0)


if __name__ == "__main__":
    key = jax.random.PRNGKey(0)
    k_x, k_w, k_b = jax.random.split(key, 3)

    # Small shapes consistent with the module: in_planes=4, planes=8, 3x3 conv.
    N, Cin, H, W = 2, 4, 16, 16
    Cout, KH, KW = 8, 3, 3

    x = jax.random.normal(k_x, (N, Cin, H, W), dtype=jnp.float32)
    fan_in = Cin * KH * KW
    bound = 1.0 / (fan_in ** 0.5)
    weight = jax.random.uniform(k_w, (Cout, Cin, KH, KW), minval=-bound,
                                maxval=bound, dtype=jnp.float32)
    bias = jax.random.uniform(k_b, (Cout,), minval=-bound, maxval=bound,
                              dtype=jnp.float32)

    out = conv3_relu(x, weight, bias)
    out = jax.block_until_ready(out)

    # Tight check against a reference fed the same bf16-quantized operands:
    # validates the kernel's conv logic independent of the intentional
    # bf16-operand rounding.
    ref_q = _reference(x.astype(jnp.bfloat16).astype(jnp.float32),
                       weight.astype(jnp.bfloat16).astype(jnp.float32), bias)
    assert out.shape == ref_q.shape == (N, Cout, H, W)
    assert jnp.allclose(out, ref_q, atol=1e-4, rtol=1e-4), \
        "mismatch vs bf16-quantized reference"

    # Loose check against the full-f32 reference: tolerance sized for bf16
    # input/weight rounding (expected max error ~5e-3 at these magnitudes).
    ref = _reference(x, weight, bias)
    assert jnp.allclose(out, ref, atol=2e-2, rtol=2e-2), "mismatch vs f32 reference"

    print("KERNEL_OK")
</pallas_src>

<mosaic_0001>
module attributes {stable_mosaic.version = 11 : i64} {
  func.func @_conv3_kernel(%arg0: i32, %arg1: memref<1x18x72xbf16, #tpu.memory_space<vmem>>, %arg2: memref<3x72x128xbf16, #tpu.memory_space<vmem>>, %arg3: memref<1x128xf32, #tpu.memory_space<vmem>>, %arg4: memref<1x16x128xf32, #tpu.memory_space<vmem>>) attributes {dimension_semantics = [#tpu.dimension_semantics<parallel>], iteration_bounds = array<i64: 2>, scalar_prefetch = 0 : i64, scratch_operands = 0 : i64, tpu.core_type = #tpu.core_type<tc>, window_params = [{transform_indices = @transform_0, window_bounds = array<i64: 1, 18, 72>}, {pipeline_mode = #tpu.pipeline_mode<synchronous>, transform_indices = @transform_1, window_bounds = array<i64: 3, 72, 128>}, {pipeline_mode = #tpu.pipeline_mode<synchronous>, transform_indices = @transform_2, window_bounds = array<i64: 1, 128>}, {transform_indices = @transform_3, window_bounds = array<i64: 1, 16, 128>}]} {
    %c0 = arith.constant 0 : index
    %c0_0 = arith.constant 0 : index
    %c0_1 = arith.constant 0 : index
    %0 = vector.load %arg1[%c0, %c0_0, %c0_1] : memref<1x18x72xbf16, #tpu.memory_space<vmem>>, vector<1x16x72xbf16>
    %1 = vector.shape_cast %0 : vector<1x16x72xbf16> to vector<16x72xbf16>
    %c0_2 = arith.constant 0 : index
    %c0_3 = arith.constant 0 : index
    %c0_4 = arith.constant 0 : index
    %2 = vector.load %arg2[%c0_2, %c0_3, %c0_4] : memref<3x72x128xbf16, #tpu.memory_space<vmem>>, vector<1x72x128xbf16>
    %3 = vector.shape_cast %2 : vector<1x72x128xbf16> to vector<72x128xbf16>
    %cst = arith.constant dense<0.000000e+00> : vector<16x128xf32>
    %4 = tpu.matmul %1, %3, %cst {dimension_numbers = #tpu.dot_dimension_numbers<[1], [0], [0], [1], [0, 0, 1, 1], [], []>} : vector<16x72xbf16>, vector<72x128xbf16>, vector<16x128xf32> -> vector<16x128xf32>
    %c0_5 = arith.constant 0 : index
    %c1 = arith.constant 1 : index
    %c0_6 = arith.constant 0 : index
    %5 = vector.load %arg1[%c0_5, %c1, %c0_6] : memref<1x18x72xbf16, #tpu.memory_space<vmem>>, vector<1x16x72xbf16>
    %6 = vector.shape_cast %5 : vector<1x16x72xbf16> to vector<16x72xbf16>
    %c1_7 = arith.constant 1 : index
    %c0_8 = arith.constant 0 : index
    %c0_9 = arith.constant 0 : index
    %7 = vector.load %arg2[%c1_7, %c0_8, %c0_9] : memref<3x72x128xbf16, #tpu.memory_space<vmem>>, vector<1x72x128xbf16>
    %8 = vector.shape_cast %7 : vector<1x72x128xbf16> to vector<72x128xbf16>
    %cst_10 = arith.constant dense<0.000000e+00> : vector<16x128xf32>
    %9 = tpu.matmul %6, %8, %cst_10 {dimension_numbers = #tpu.dot_dimension_numbers<[1], [0], [0], [1], [0, 0, 1, 1], [], []>} : vector<16x72xbf16>, vector<72x128xbf16>, vector<16x128xf32> -> vector<16x128xf32>
    %10 = arith.addf %4, %9 : vector<16x128xf32>
    %c0_11 = arith.constant 0 : index
    %c2 = arith.constant 2 : index
    %c0_12 = arith.constant 0 : index
    %11 = vector.load %arg1[%c0_11, %c2, %c0_12] : memref<1x18x72xbf16, #tpu.memory_space<vmem>>, vector<1x16x72xbf16>
    %12 = vector.shape_cast %11 : vector<1x16x72xbf16> to vector<16x72xbf16>
    %c2_13 = arith.constant 2 : index
    %c0_14 = arith.constant 0 : index
    %c0_15 = arith.constant 0 : index
    %13 = vector.load %arg2[%c2_13, %c0_14, %c0_15] : memref<3x72x128xbf16, #tpu.memory_space<vmem>>, vector<1x72x128xbf16>
    %14 = vector.shape_cast %13 : vector<1x72x128xbf16> to vector<72x128xbf16>
    %cst_16 = arith.constant dense<0.000000e+00> : vector<16x128xf32>
    %15 = tpu.matmul %12, %14, %cst_16 {dimension_numbers = #tpu.dot_dimension_numbers<[1], [0], [0], [1], [0, 0, 1, 1], [], []>} : vector<16x72xbf16>, vector<72x128xbf16>, vector<16x128xf32> -> vector<16x128xf32>
    %16 = arith.addf %10, %15 : vector<16x128xf32>
    %c0_17 = arith.constant 0 : index
    %c0_18 = arith.constant 0 : index
    %17 = vector.load %arg3[%c0_17, %c0_18] : memref<1x128xf32, #tpu.memory_space<vmem>>, vector<1x128xf32>
    %18 = vector.broadcast %17 : vector<1x128xf32> to vector<16x128xf32>
    %19 = arith.addf %16, %18 : vector<16x128xf32>
    %cst_19 = arith.constant 0.000000e+00 : f32
    %20 = vector.broadcast %cst_19 : f32 to vector<16x128xf32>
    %21 = arith.maximumf %19, %20 : vector<16x128xf32>
    %c0_20 = arith.constant 0 : index
    %c0_21 = arith.constant 0 : index
    %c0_22 = arith.constant 0 : index
    %22 = vector.load %arg4[%c0_20, %c0_21, %c0_22] : memref<1x16x128xf32, #tpu.memory_space<vmem>>, vector<1x16x128xf32>
    %23 = vector.shape_cast %22 : vector<1x16x128xf32> to vector<16x128xf32>
    %24 = vector.shape_cast %21 : vector<16x128xf32> to vector<1x16x128xf32>
    tpu.vector_store %arg4[%c0_20, %c0_21, %c0_22], %24 {strides = array<i32>} : memref<1x16x128xf32, #tpu.memory_space<vmem>>, vector<1x16x128xf32>,
    return
  }
  func.func @transform_0(%arg0: i32) -> (i32, i32, i32) {
    %c0_i32 = arith.constant 0 : i32
    %c0_i32_0 = arith.constant 0 : i32
    %c0_i32_1 = arith.constant 0 : i32
    return %arg0, %c0_i32, %c0_i32_0 : i32, i32, i32
  }
  func.func @transform_1(%arg0: i32) -> (i32, i32, i32) {
    %c0_i32 = arith.constant 0 : i32
    %c0_i32_0 = arith.constant 0 : i32
    %c0_i32_1 = arith.constant 0 : i32
    %c0_i32_2 = arith.constant 0 : i32
    return %c0_i32, %c0_i32_0, %c0_i32_1 : i32, i32, i32
  }
  func.func @transform_2(%arg0: i32) -> (i32, i32) {
    %c0_i32 = arith.constant 0 : i32
    %c0_i32_0 = arith.constant 0 : i32
    %c0_i32_1 = arith.constant 0 : i32
    return %c0_i32, %c0_i32_0 : i32, i32
  }
  func.func @transform_3(%arg0: i32) -> (i32, i32, i32) {
    %c0_i32 = arith.constant 0 : i32
    %c0_i32_0 = arith.constant 0 : i32
    %c0_i32_1 = arith.constant 0 : i32
    return %arg0, %c0_i32, %c0_i32_0 : i32, i32, i32
  }
}

</mosaic_0001>

<llo_original>
// kernel: tpu_custom_call.1
$region0: #{tpu_custom_call.1}
  #allocation0 [shape = 'u32[]', space=smem, size = 0x4, offset = 0x4, fixed_abs, tag = 'smem constant byte address 0x4 - core index']
  #allocation1 [shape = 'u32[144,128]{1,0:T(1,128)}', space=vmem, size = 0x12000, scoped, tag = 'internal scratch']
  %s0 = inlined_call_operand.vmem [shape: bf16[2,18,72], index: 0, kind: input, shape index: {}]
  %s1 = inlined_call_operand.hbm [shape: bf16[3,72,128], index: 1, kind: input, shape index: {}]
  %s2 = inlined_call_operand.vmem [shape: f32[1,128], index: 2, kind: input, shape index: {}]
  %s3 = inlined_call_operand.hbm [shape: f32[2,16,128], index: 3, kind: output, shape index: {}]
  %s4 = sld [smem:[#allocation0]]
  $region49: #{tpu_custom_call.1} parent=0
    _
  %s6 = ssub.s32 1, %s4
  %s7 = scalar_select 0, %s6, %s4
  $region1: #{tpu_custom_call.1} parent=0
    #allocation2 [shape = 'u8[55296]{0}', space=vmem, size = 0xd800, scoped, tag = 'input window, operand 1, single buffered']
    #allocation3 [shape = 's32[2]{0}', space=sflag, size = 0x8, scoped, tag = 'scoped memory for tpu_custom_call.1']
    #allocation4 [shape = 's32[2]{0}', space=sflag, size = 0x8, scoped, tag = 'scoped memory for tpu_custom_call.1']
    #allocation5 [shape = 'u8[16384]{0}', space=vmem, size = 0x4000, scoped, tag = 'output window, operand 0']
    %8 = vsyncpa [#allocation3], 0
    %9 = vsyncpa [#allocation4], 0
    %s10 = scalar_lea.sflag [#allocation4], 1
    %11 = vsyncpa %s10, 0
    loop: start=0, step=1, limit=4
    $region2: #{tpu_custom_call.1} parent=1 // loop_pre_header
      _
    $region3: #{tpu_custom_call.1} parent=1 // loop_header
      %s13 = sphi 0, %s17
      %p14 = scmp.ge.s32.totalorder %s13, 4
      %s23 = sphi 0, %s25
      %s26 = sphi 0, %s23
      %s27 = sphi 0, %s26
      %s43 = sphi 0, %s27
      %s47 = sphi 0, %s47
      %s49 = sphi 0, %s47
      %s50 = sphi 0, %s49
      %s64 = sphi 0, %s50
      %s68 = sphi 0, %s68
      %s70 = sphi 0, %s68
      %s71 = sphi 0, %s70
      %s85 = sphi 0, %s71
      %s91 = sphi 0, %s93
      %s94 = sphi 0, %s91
      %s95 = sphi 0, %s94
      %s111 = sphi 0, %s95
    $region4: #{tpu_custom_call.1} parent=1 // loop_header_branch
      %16 = sbr.rel (%p14) target = $region8
    $region5: #{tpu_custom_call.1} parent=1 // loop_body
      %s18 = ssub.s32 %s13, 1
      %s19 = ssub.s32 %s13, 2
      %s20 = sadd.s32 %s13, 1
      %s21 = ssub.s32 %s13, %s20
      %p22 = scmp.eq.s32.totalorder %s21, 0
      %s24 = sadd.s32 %s23, 1
      %s25 = scalar_select %p22, %s23, %s24
      %p28 = pneg %p22
      %p29 = scmp.eq.s32.totalorder %s13, 1
      %p30 = por %p28, %p29
      %p31 = scmp.ne.s32.totalorder %s23, %s26
      %p32 = scmp.eq.s32.totalorder %s13, 0
      %p33 = por %p31, %p32
      %p34 = scmp.ne.s32.totalorder %s23, %s26
      %p35 = scmp.eq.s32.totalorder %s18, 1
      %p36 = por %p34, %p35
      %p37 = scmp.ne.s32.totalorder %s26, %s27
      %p38 = scmp.eq.s32.totalorder %s18, 0
      %p39 = por %p37, %p38
      %p40 = scmp.ne.s32.totalorder %s26, %s27
      %p41 = scmp.eq.s32.totalorder %s19, 1
      %p42 = por %p40, %p41
      %p44 = scmp.ne.s32.totalorder %s27, %s43
      %p45 = scmp.eq.s32.totalorder %s19, 0
      %p46 = por %p44, %p45
      %s48 = sadd.s32 %s47, 1
      %p51 = scmp.eq.s32.totalorder %s13, 1
      %p52 = scmp.ne.s32.totalorder %s47, %s49
      %p53 = scmp.eq.s32.totalorder %s13, 0
      %p54 = por %p52, %p53
      %p55 = scmp.ne.s32.totalorder %s47, %s49
      %p56 = scmp.eq.s32.totalorder %s18, 1
      %p57 = por %p55, %p56
      %p58 = scmp.ne.s32.totalorder %s49, %s50
      %p59 = scmp.eq.s32.totalorder %s18, 0
      %p60 = por %p58, %p59
      %p61 = scmp.ne.s32.totalorder %s49, %s50
      %p62 = scmp.eq.s32.totalorder %s19, 1
      %p63 = por %p61, %p62
      %p65 = scmp.ne.s32.totalorder %s50, %s64
      %p66 = scmp.eq.s32.totalorder %s19, 0
      %p67 = por %p65, %p66
      %s69 = sadd.s32 %s68, 1
      %p72 = scmp.eq.s32.totalorder %s13, 1
      %p73 = scmp.ne.s32.totalorder %s68, %s70
      %p74 = scmp.eq.s32.totalorder %s13, 0
      %p75 = por %p73, %p74
      %p76 = scmp.ne.s32.totalorder %s68, %s70
      %p77 = scmp.eq.s32.totalorder %s18, 1
      %p78 = por %p76, %p77
      %p79 = scmp.ne.s32.totalorder %s70, %s71
      %p80 = scmp.eq.s32.totalorder %s18, 0
      %p81 = por %p79, %p80
      %p82 = scmp.ne.s32.totalorder %s70, %s71
      %p83 = scmp.eq.s32.totalorder %s19, 1
      %p84 = por %p82, %p83
      %p86 = scmp.ne.s32.totalorder %s71, %s85
      %p87 = scmp.eq.s32.totalorder %s19, 0
      %p88 = por %p86, %p87
      %s89 = ssub.s32 %s13, %s20
      %p90 = scmp.eq.s32.totalorder %s89, 0
      %s92 = sadd.s32 %s91, 1
      %s93 = scalar_select %p90, %s91, %s92
      %p96 = pneg %p90
      %p97 = scmp.eq.s32.totalorder %s13, 1
      %p98 = por %p96, %p97
      %p99 = scmp.ne.s32.totalorder %s91, %s94
      %p100 = scmp.eq.s32.totalorder %s13, 0
      %p101 = por %p99, %p100
      %p102 = scmp.ne.s32.totalorder %s91, %s94
      %p103 = scmp.eq.s32.totalorder %s18, 1
      %p104 = por %p102, %p103
      %p105 = scmp.ne.s32.totalorder %s94, %s95
      %p106 = scmp.eq.s32.totalorder %s18, 0
      %p107 = por %p105, %p106
      %p108 = scmp.ne.s32.totalorder %s94, %s95
      %p109 = scmp.eq.s32.totalorder %s19, 1
      %p110 = por %p108, %p109
      %p112 = scmp.ne.s32.totalorder %s95, %s111
      %p113 = scmp.eq.s32.totalorder %s19, 0
      %p114 = por %p112, %p113
      %p115 = scmp.le.s32.totalorder 1, %s13
      %p116 = scmp.lt.s32.totalorder %s13, 3
      %p117 = pnand %p115, %p116
      %p118 = pneg %p117
      // Predicated region
      $region9: #{tpu_custom_call.1} parent=5 // pred_check
        _
      $region10: #{tpu_custom_call.1} parent=5 // pred_check_branch
        %120 = sbr.rel (%p117) target = $region12
      $region11: #{tpu_custom_call.1} parent=5 // pred_region
        %s121 = ssub.s32 %s13, 1
        // Predicated region
        $region13: #{tpu_custom_call.1} parent=11 // pred_check
          %p122 = pneg %p60
        $region14: #{tpu_custom_call.1} parent=11 // pred_check_branch
          %124 = sbr.rel (%p122) target = $region16
        $region15: #{tpu_custom_call.1} parent=11 // pred_region
          %s126 = ssub.s32 1728, 1728
          %127 = vsyncadd [#allocation3], %s126
          %s128 = sshll.u32 [#allocation2], 4
          %s129 = int_to_ptr.vmem [resolvable:$true] %s128
          %134 = dma.hbm_to_vmem [thread:$0]  %s1, 1728, %s129, [#allocation3], 64, 64, 4
        $region16: #{tpu_custom_call.1} parent=11 // pred_fallthru
          _
        // Predicated region
        $region17: #{tpu_custom_call.1} parent=11 // pred_check
          %p135 = pneg %p81
        $region18: #{tpu_custom_call.1} parent=11 // pred_check_branch
          %137 = sbr.rel (%p135) target = $region20
        $region19: #{tpu_custom_call.1} parent=11 // pred_region
          _
        $region20: #{tpu_custom_call.1} parent=11 // pred_fallthru
          _
      $region12: #{tpu_custom_call.1} parent=5 // pred_fallthru
        _
      %p138 = scmp.lt.s32.totalorder %s13, 2
      // Predicated region
      $region21: #{tpu_custom_call.1} parent=5 // pred_check
        %p139 = pneg %p138
      $region22: #{tpu_custom_call.1} parent=5 // pred_check_branch
        %141 = sbr.rel (%p139) target = $region24
      $region23: #{tpu_custom_call.1} parent=5 // pred_region
        // Predicated region
        $region25: #{tpu_custom_call.1} parent=23 // pred_check
          %p142 = pneg %p33
        $region26: #{tpu_custom_call.1} parent=23 // pred_check_branch
          %144 = sbr.rel (%p142) target = $region28
        $region27: #{tpu_custom_call.1} parent=23 // pred_region
          %p145 = scmp.lt.s32.totalorder %s13, 1
          %s146 = scalar_select %p145, %s13, 1
          %s147 = smul.addr %s146, 3
          %s148 = smul.addr %s147, 4
          %s149 = scalar_lea.vmem %s0, %s148
        $region28: #{tpu_custom_call.1} parent=23 // pred_fallthru
          _
      $region24: #{tpu_custom_call.1} parent=5 // pred_fallthru
        _
      %p150 = scmp.le.s32.totalorder 1, %s13
      %p151 = scmp.lt.s32.totalorder %s13, 3
      %p152 = pnand %p150, %p151
      %p153 = pneg %p152
      // Predicated region
      $region29: #{tpu_custom_call.1} parent=5 // pred_check
        _
      $region30: #{tpu_custom_call.1} parent=5 // pred_check_branch
        %155 = sbr.rel (%p152) target = $region32
      $region31: #{tpu_custom_call.1} parent=5 // pred_region
        %s156 = ssub.s32 %s13, 1
        // Predicated region
        $region33: #{tpu_custom_call.1} parent=31 // pred_check
          %p157 = pneg %p60
        $region34: #{tpu_custom_call.1} parent=31 // pred_check_branch
          %159 = sbr.rel (%p157) target = $region36
        $region35: #{tpu_custom_call.1} parent=31 // pred_region
          %160 = dma.done [#allocation3], 1728
        $region36: #{tpu_custom_call.1} parent=31 // pred_fallthru
          _
        %p161 = scmp.lt.s32.totalorder %s18, 1
        %s162 = scalar_select %p161, %s18, 1
        %s163 = smul.addr %s162, 3
        %s164 = smul.addr %s163, 4
        %s165 = scalar_lea.vmem %s0, %s164
        %p166 = pneg %p39
        %p167 = pneg %p36
        %p168 = pneg %p60
        %p169 = pneg %p57
        %p170 = pneg %p81
        %p171 = pneg %p78
        %p172 = pneg %p107
        %p173 = pneg %p104
        %s174 = sand.u32 %s94, 1
        %s175 = scalar_lea.sflag [#allocation4], %s174
        %s176 = sand.u32 %s94, 1
        %s177 = smul.addr %s176, 16
        %s178 = scalar_lea.vmem [#allocation5], %s177
        %p179 = scmp.lt.s32.totalorder %s18, 1
        %s180 = scalar_select %p179, %s18, 1
        %s181 = smul.addr %s180, 3
        %s182 = smul.addr %s181, 4
        %s183 = scalar_lea.vmem %s0, %s182
        %v185 = vld [vmem:[%s183] sm:$0xf]
        %v186 = vld [vmem:[%s183 + $0x4] sm:$0xf]
        %v187 = vld [vmem:[#allocation2] sm:$0xf]
        %v188 = vld [vmem:[#allocation2 + $0x4] sm:$0xf]
        %v189 = vld [vmem:[#allocation2 + $0x8] sm:$0xf]
        %v190 = vld [vmem:[#allocation2 + $0xc] sm:$0xf]
        %v191 = vld [vmem:[#allocation2 + $0x10] sm:$0xf]
        %v192 = vld [vmem:[#allocation2 + $0x14] sm:$0xf]
        %v193 = vld [vmem:[#allocation2 + $0x18] sm:$0xf]
        %v194 = vld [vmem:[#allocation2 + $0x1c] sm:$0xf]
        %v195 = vld [vmem:[#allocation2 + $0x20] sm:$0xf]
        %v196 = vld [vmem:[%s183 + $0x8] sm:$0x1]
        %s197 = scalar_lea.vmem [#allocation2], 36
        %v198 = vld [vmem:[%s197] sm:$0xf]
        %v199 = vld [vmem:[%s197 + $0x4] sm:$0xf]
        %v200 = vld [vmem:[%s197 + $0x8] sm:$0xf]
        %v201 = vld [vmem:[%s197 + $0xc] sm:$0xf]
        %v202 = vld [vmem:[%s197 + $0x10] sm:$0xf]
        %v203 = vld [vmem:[%s197 + $0x14] sm:$0xf]
        %v204 = vld [vmem:[%s197 + $0x18] sm:$0xf]
        %v205 = vld [vmem:[%s197 + $0x1c] sm:$0xf]
        %v206 = vld [vmem:[%s197 + $0x20] sm:$0xf]
        %v210 = vunpack.c.l.b16 %v185
        %v211 = vunpack.c.l.b16 %v186
        %v212 = vunpack.c.l.b16 %v196
        %v213 = vpack.c.b16 %v211, %v210
        %v214 = vpack.c.b16 %v212, %v212
        %vm215 = vsmask.f32 7424
        %v217 = vshrl.u32 %v213, 16
        %v219 = vshll.u32 %v213, 16
        %v221 = vrot.slane %v219, 1
        %v222 = vor.u32 %v217, %v221
        %v224 = vshll.u32 %v214, 16
        %v226 = vrot.slane %v224, 1
        %v227 = vsel %vm215, %v222, %v226
        %v237 = vunpack.c.l.b16 %v198
        %v238 = vunpack.c.l.b16 %v199
        %v239 = vunpack.c.l.b16 %v200
        %v240 = vunpack.c.l.b16 %v201
        %v241 = vunpack.c.l.b16 %v202
        %v242 = vunpack.c.l.b16 %v203
        %v243 = vunpack.c.l.b16 %v204
        %v244 = vunpack.c.l.b16 %v205
        %v245 = vunpack.c.l.b16 %v206
        %v246 = vpack.c.b16 %v238, %v237
        %v247 = vpack.c.b16 %v240, %v239
        %v248 = vpack.c.b16 %v242, %v241
        %v249 = vpack.c.b16 %v244, %v243
        %v250 = vpack.c.b16 %v245, %v245
        %vm255 = vcmask 588800
        %v257 = vsel %vm255, %v227, 0
        %vm259 = vcmask 1043456
        %v261 = vsel %vm259, %v250, 0
        %263 = vmatprep.subr.bf16.mxu0 0
        %264 = vmatpush1.bf16.msra.mxu0 %v246
        %265 = vmatprep.subr.bf16.mxu0 0
        %266 = vmatpush1.bf16.msra.mxu0 %v247
        %267 = vmatprep.subr.bf16.mxu0 0
        %268 = vmatpush1.bf16.msra.mxu0 %v248
        %269 = vmatprep.subr.bf16.mxu0 0
        %270 = vmatpush1.bf16.msra.mxu0 %v249
        %271 = vmatprep.subr.bf16.mxu0 0
        %272 = vmatpush1.bf16.msra.mxu0 %v261
        %273 = vmatprep.subr.bf16.mxu0 0
        %274 = vmatpush1.bf16.msra.mxu0 0
        %275 = vmatprep.subr.bf16.mxu0 0
        %276 = vmatpush1.bf16.msra.mxu0 0
        %277 = vmatprep.subr.bf16.mxu0 0
        %278 = vmatpush1.bf16.msra.mxu0 0
        %279 = vmatprep.subr.bf16.mxu0 0
        %280 = vmatpush1.bf16.msra.mxu0 0
        %281 = vmatprep.subr.bf16.mxu0 0
        %282 = vmatpush1.bf16.msra.mxu0 0
        %283 = vmatprep.subr.bf16.mxu0 0
        %284 = vmatpush1.bf16.msra.mxu0 0
        %285 = vmatprep.subr.bf16.mxu0 0
        %286 = vmatpush1.bf16.msra.mxu0 0
        %287 = vmatprep.subr.bf16.mxu0 0
        %288 = vmatpush1.bf16.msra.mxu0 0
        %289 = vmatprep.subr.bf16.mxu0 0
        %290 = vmatpush1.bf16.msra.mxu0 0
        %291 = vmatprep.subr.bf16.mxu0 0
        %292 = vmatpush1.bf16.msra.mxu0 0
        %293 = vmatprep.subr.bf16.mxu0 0
        %294 = vmatpush1.bf16.msra.mxu0 0
        %295 = vmatprep.mubr.bf16.mxu0 0
        %296 = vmatmul.mubr.bf16.gmra.mrb[0].mxu0 %v257
        %v297 = vpop.f32.mrb[0].mxu0
        %v298 = vadd.f32 0.0, %v297
        %v299 = vpop.f32.mrb[0].mxu0
        %v300 = vpop.f32.mrb[0].mxu0
        %v301 = vadd.f32 0.0, %v300
        %v302 = vpop.f32.mrb[0].mxu0
        %303 = vdwg.mxu0
        %v313 = vunpack.c.l.b16 %v187
        %v314 = vunpack.c.l.b16 %v188
        %v315 = vunpack.c.l.b16 %v189
        %v316 = vunpack.c.l.b16 %v190
        %v317 = vunpack.c.l.b16 %v191
        %v318 = vunpack.c.l.b16 %v192
        %v319 = vunpack.c.l.b16 %v193
        %v320 = vunpack.c.l.b16 %v194
        %v321 = vunpack.c.l.b16 %v195
        %v322 = vpack.c.b16 %v314, %v313
        %v323 = vpack.c.b16 %v316, %v315
        %v324 = vpack.c.b16 %v318, %v317
        %v325 = vpack.c.b16 %v320, %v319
        %v326 = vpack.c.b16 %v321, %v321
        %v331 = vsel %vm255, %v213, 0
        %v334 = vsel %vm259, %v326, 0
        %336 = vmatprep.subr.bf16.mxu0 0
        %337 = vmatpush1.bf16.msra.mxu0 %v322
        %338 = vmatprep.subr.bf16.mxu0 0
        %339 = vmatpush1.bf16.msra.mxu0 %v323
        %340 = vmatprep.subr.bf16.mxu0 0
        %341 = vmatpush1.bf16.msra.mxu0 %v324
        %342 = vmatprep.subr.bf16.mxu0 0
        %343 = vmatpush1.bf16.msra.mxu0 %v325
        %344 = vmatprep.subr.bf16.mxu0 0
        %345 = vmatpush1.bf16.msra.mxu0 %v334
        %346 = vmatprep.subr.bf16.mxu0 0
        %347 = vmatpush1.bf16.msra.mxu0 0
        %348 = vmatprep.subr.bf16.mxu0 0
        %349 = vmatpush1.bf16.msra.mxu0 0
        %350 = vmatprep.subr.bf16.mxu0 0
        %351 = vmatpush1.bf16.msra.mxu0 0
        %352 = vmatprep.subr.bf16.mxu0 0
        %353 = vmatpush1.bf16.msra.mxu0 0
        %354 = vmatprep.subr.bf16.mxu0 0
        %355 = vmatpush1.bf16.msra.mxu0 0
        %356 = vmatprep.subr.bf16.mxu0 0
        %357 = vmatpush1.bf16.msra.mxu0 0
        %358 = vmatprep.subr.bf16.mxu0 0
        %359 = vmatpush1.bf16.msra.mxu0 0
        %360 = vmatprep.subr.bf16.mxu0 0
        %361 = vmatpush1.bf16.msra.mxu0 0
        %362 = vmatprep.subr.bf16.mxu0 0
        %363 = vmatpush1.bf16.msra.mxu0 0
        %364 = vmatprep.subr.bf16.mxu0 0
        %365 = vmatpush1.bf16.msra.mxu0 0
        %366 = vmatprep.subr.bf16.mxu0 0
        %367 = vmatpush1.bf16.msra.mxu0 0
        %368 = vmatprep.mubr.bf16.mxu0 0
        %369 = vmatmul.mubr.bf16.gmra.mrb[0].mxu0 %v331
        %v370 = vpop.f32.mrb[0].mxu0
        %v371 = vadd.f32 %v298, %v370
        %v372 = vpop.f32.mrb[0].mxu0
        %v373 = vpop.f32.mrb[0].mxu0
        %v374 = vadd.f32 %v301, %v373
        %v375 = vpop.f32.mrb[0].mxu0
        %376 = vdwg.mxu0
        %v377 = vld [vmem:[%s183] sm:$0xe]
        %s378 = scalar_lea.vmem [#allocation2], 72
        %v379 = vld [vmem:[%s378] sm:$0xf]
        %v380 = vld [vmem:[%s378 + $0x4] sm:$0xf]
        %v381 = vld [vmem:[%s378 + $0x8] sm:$0xf]
        %v382 = vld [vmem:[%s378 + $0xc] sm:$0xf]
        %v383 = vld [vmem:[%s378 + $0x10] sm:$0xf]
        %v384 = vld [vmem:[%s378 + $0x14] sm:$0xf]
        %v385 = vld [vmem:[%s378 + $0x18] sm:$0xf]
        %v386 = vld [vmem:[%s378 + $0x1c] sm:$0xf]
        %v387 = vld [vmem:[%s378 + $0x20] sm:$0xf]
        %v389 = vunpack.c.l.b16 %v377
        %v390 = vpack.c.b16 %v211, %v389
        %vm391 = vcmask 1046528
        %v392 = vrot.slane %v390, 1
        %v393 = vrot.slane %v214, 1
        %v394 = vsel %vm391, %v392, %v393
        %v404 = vunpack.c.l.b16 %v379
        %v405 = vunpack.c.l.b16 %v380
        %v406 = vunpack.c.l.b16 %v381
        %v407 = vunpack.c.l.b16 %v382
        %v408 = vunpack.c.l.b16 %v383
        %v409 = vunpack.c.l.b16 %v384
        %v410 = vunpack.c.l.b16 %v385
        %v411 = vunpack.c.l.b16 %v386
        %v412 = vunpack.c.l.b16 %v387
        %v413 = vpack.c.b16 %v405, %v404
        %v414 = vpack.c.b16 %v407, %v406
        %v415 = vpack.c.b16 %v409, %v408
        %v416 = vpack.c.b16 %v411, %v410
        %v417 = vpack.c.b16 %v412, %v412
        %v423 = vsel %vm255, %v394, 0
        %v426 = vsel %vm259, %v417, 0
        %428 = vmatprep.subr.bf16.mxu0 0
        %429 = vmatpush1.bf16.msra.mxu0 %v413
        %430 = vmatprep.subr.bf16.mxu0 0
        %431 = vmatpush1.bf16.msra.mxu0 %v414
        %432 = vmatprep.subr.bf16.mxu0 0
        %433 = vmatpush1.bf16.msra.mxu0 %v415
        %434 = vmatprep.subr.bf16.mxu0 0
        %435 = vmatpush1.bf16.msra.mxu0 %v416
        %436 = vmatprep.subr.bf16.mxu0 0
        %437 = vmatpush1.bf16.msra.mxu0 %v426
        %438 = vmatprep.subr.bf16.mxu0 0
        %439 = vmatpush1.bf16.msra.mxu0 0
        %440 = vmatprep.subr.bf16.mxu0 0
        %441 = vmatpush1.bf16.msra.mxu0 0
        %442 = vmatprep.subr.bf16.mxu0 0
        %443 = vmatpush1.bf16.msra.mxu0 0
        %444 = vmatprep.subr.bf16.mxu0 0
        %445 = vmatpush1.bf16.msra.mxu0 0
        %446 = vmatprep.subr.bf16.mxu0 0
        %447 = vmatpush1.bf16.msra.mxu0 0
        %448 = vmatprep.subr.bf16.mxu0 0
        %449 = vmatpush1.bf16.msra.mxu0 0
        %450 = vmatprep.subr.bf16.mxu0 0
        %451 = vmatpush1.bf16.msra.mxu0 0
        %452 = vmatprep.subr.bf16.mxu0 0
        %453 = vmatpush1.bf16.msra.mxu0 0
        %454 = vmatprep.subr.bf16.mxu0 0
        %455 = vmatpush1.bf16.msra.mxu0 0
        %456 = vmatprep.subr.bf16.mxu0 0
        %457 = vmatpush1.bf16.msra.mxu0 0
        %458 = vmatprep.subr.bf16.mxu0 0
        %459 = vmatpush1.bf16.msra.mxu0 0
        %460 = vmatprep.mubr.bf16.mxu0 0
        %461 = vmatmul.mubr.bf16.gmra.mrb[0].mxu0 %v423
        %v462 = vpop.f32.mrb[0].mxu0
        %v463 = vadd.f32 0.0, %v462
        %v464 = vpop.f32.mrb[0].mxu0
        %v465 = vpop.f32.mrb[0].mxu0
        %v466 = vadd.f32 0.0, %v465
        %v467 = vpop.f32.mrb[0].mxu0
        %468 = vdwg.mxu0
        %v469 = vadd.f32 %v371, %v463
        %v470 = vadd.f32 %v374, %v466
        %v471 = vld [vmem:[%s2] sm:$0x1]
        %v473 = vlaneseq
        %v474 = vshrl.u32 %v473, 7
        %v475 = vsub.s32 0, %v474
        %v476 = vrot.slane %v471, %v475
        %v478 = vadd.f32 %v469, %v476
        %v479 = vadd.f32 %v470, %v476
        %v480 = vmax.f32 %v478, 0.0
        %v481 = vmax.f32 %v479, 0.0
        %482 = vst [vmem:[%s178] sm:$0xff] %v480
        %483 = vst [vmem:[%s178 + $0x8] sm:$0xff] %v481
        %s484 = sand.u32 %s94, 1
        %s485 = scalar_lea.sflag [#allocation4], %s484
        %s486 = sand.u32 %s94, 1
        %s487 = smul.addr %s486, 16
        %s488 = scalar_lea.vmem [#allocation5], %s487
        // Predicated region
        $region37: #{tpu_custom_call.1} parent=31 // pred_check
          %p489 = pneg %p104
        $region38: #{tpu_custom_call.1} parent=31 // pred_check_branch
          %491 = sbr.rel (%p489) target = $region40
        $region39: #{tpu_custom_call.1} parent=31 // pred_region
          %s493 = ssub.s32 256, 256
          %494 = vsyncadd %s485, %s493
          %s495 = smul.addr %s18, 2
          %s496 = smul.addr %s495, 128
          %s497 = scalar_lea.hbm %s3, %s496
          %s498 = sshll.u32 %s488, 4
          %s499 = int_to_ptr.vmem [resolvable:$true] %s498
          %504 = dma.vmem_to_hbm [thread:$0]  %s499, 256, %s497, %s485, 128, 128, 8
        $region40: #{tpu_custom_call.1} parent=31 // pred_fallthru
          _
      $region32: #{tpu_custom_call.1} parent=5 // pred_fallthru
        _
      %p505 = scmp.le.s32.totalorder 2, %s13
      // Predicated region
      $region41: #{tpu_custom_call.1} parent=5 // pred_check
        %p506 = pneg %p505
      $region42: #{tpu_custom_call.1} parent=5 // pred_check_branch
        %508 = sbr.rel (%p506) target = $region44
      $region43: #{tpu_custom_call.1} parent=5 // pred_region
        %s509 = ssub.s32 %s13, 2
        // Predicated region
        $region45: #{tpu_custom_call.1} parent=43 // pred_check
          %p510 = pneg %p110
        $region46: #{tpu_custom_call.1} parent=43 // pred_check_branch
          %512 = sbr.rel (%p510) target = $region48
        $region47: #{tpu_custom_call.1} parent=43 // pred_region
          %s513 = sand.u32 %s95, 1
          %s514 = scalar_lea.sflag [#allocation4], %s513
          %s515 = sand.u32 %s95, 1
          %s516 = smul.addr %s515, 16
          %s517 = scalar_lea.vmem [#allocation5], %s516
          %518 = dma.done %s514, 256
        $region48: #{tpu_custom_call.1} parent=43 // pred_fallthru
          _
      $region44: #{tpu_custom_call.1} parent=5 // pred_fallthru
        _
    $region6: #{tpu_custom_call.1} parent=1 // loop_footer
      %s17 = sadd.s32 1, %s13
    $region7: #{tpu_custom_call.1} parent=1 // loop_footer_branch
      %12 = sbr.rel target = $region3
    $region8: #{tpu_custom_call.1} parent=1 // loop_exit
      _
    %519 = vsyncpa [#allocation3], 1
    %s520 = scalar_lea.sflag [#allocation3], 1
    %521 = vsyncpa %s520, 1
    %522 = vsyncpa [#allocation4], 1
    %s523 = scalar_lea.sflag [#allocation4], 1
    %524 = vsyncpa %s523, 1

</llo_original>
